<compile_context>
chip_gen: v6e
topology: v6e:2x2x1
jax: 0.10.0
libtpu: 0.0.40
codegen_flags: <defaults>
</compile_context>

<pallas_src>
import functools

import jax
import jax.numpy as jnp
from jax.experimental import pallas as pl
from jax.experimental.pallas import tpu as pltpu


_MIN_PAIR_BYTES = 1 << 20   # never shrink a step's (in+out) tile below ~1 MiB
_TARGET_STEPS = 8           # >= 4 steps per TensorCore on 2-TC (v7x) chips


def _round_up(v, m):
    return (v + m - 1) // m * m


def _sublane_multiple(itemsize):
    # vreg sublane packing: f32 -> 8 rows, bf16/f16 -> 16, int8/fp8 -> 32.
    return max(8, 32 // max(1, int(itemsize)))


def _vmem_plan():
    """Returns (per-(in+out)-pair budget bytes, vmem_limit_bytes), per generation."""
    cap = 64 * 1024 * 1024  # conservative default: v7x per-TensorCore VMEM
    try:
        info = pltpu.get_tpu_info()
        cap = int(getattr(info, "vmem_capacity_bytes", cap))
    except Exception:
        pass
    vmem_limit = int(cap * 7 // 10)      # ~90 MiB on v5e/v6e, ~45 MiB on v7x
    pair_budget = vmem_limit // 3        # 2x double-buffered (in+out) + headroom
    return pair_budget, vmem_limit


def _choose_plane_block(nc, pair_bytes, pair_budget):
    """How many (H, W) planes per grid step."""
    blk_budget = min(nc, max(1, pair_budget // pair_bytes))
    blk_target = pl.cdiv(nc, _TARGET_STEPS)                      # aim for >= 8 steps
    blk_floor = max(1, min(nc, _MIN_PAIR_BYTES // pair_bytes))   # ...but not tiny tiles
    return int(min(blk_budget, max(blk_target, blk_floor)))


def _choose_row_tile(H, W, Wo, itemsize, pair_budget):
    """Row-tile height for the manual H-tiled fallback."""
    sub = _sublane_multiple(itemsize)
    row_bytes = (_round_up(W, 128) + _round_up(Wo, 128)) * itemsize
    th = max(sub, int(pair_budget // row_bytes))
    th = min(th, _round_up(H, sub))
    th = max(sub, (th // sub) * sub)
    return int(th)


def _circular_pad_kernel(x_ref, o_ref, *, pad):
    """x_ref: (blk, H, W); o_ref: (blk, H+pt+pb, W+pl+pr). Disjoint direct stores."""
    p_l, p_r, p_t, p_b = pad
    H = x_ref.shape[1]
    W = x_ref.shape[2]

    # Interior first: the one big store.  Halo/corner stores below each re-read
    # only a thin x_ref slice, so the full tile is never live across many stores.
    o_ref[:, p_t:p_t + H, p_l:p_l + W] = x_ref[...]

    # Height halos (wrapped rows).
    if p_t:
        o_ref[:, 0:p_t, p_l:p_l + W] = x_ref[:, H - p_t:H, :]
    if p_b:
        o_ref[:, p_t + H:p_t + H + p_b, p_l:p_l + W] = x_ref[:, 0:p_b, :]

    # Width halos (wrapped columns).
    if p_l:
        o_ref[:, p_t:p_t + H, 0:p_l] = x_ref[:, :, W - p_l:W]
    if p_r:
        o_ref[:, p_t:p_t + H, p_l + W:p_l + W + p_r] = x_ref[:, :, 0:p_r]

    # Corners (wrapped in both dims).
    if p_t and p_l:
        o_ref[:, 0:p_t, 0:p_l] = x_ref[:, H - p_t:H, W - p_l:W]
    if p_t and p_r:
        o_ref[:, 0:p_t, p_l + W:p_l + W + p_r] = x_ref[:, H - p_t:H, 0:p_r]
    if p_b and p_l:
        o_ref[:, p_t + H:p_t + H + p_b, 0:p_l] = x_ref[:, 0:p_b, W - p_l:W]
    if p_b and p_r:
        o_ref[:, p_t + H:p_t + H + p_b, p_l + W:p_l + W + p_r] = x_ref[:, 0:p_b, 0:p_r]


def _circular_pad_htiled_kernel(x_hbm, o_hbm, xbuf, obuf, *, pad, H, W, th):
    """Fallback for planes too large to double-buffer whole: one plane per grid
    step, rows streamed HBM->VMEM->HBM in tiles of <= th rows.

    All three output row regions (interior / top halo / bottom halo) map to a
    *contiguous* input row range, so every DMA has a static size.
    """
    p_l, p_r, p_t, p_b = pad
    Wo = W + p_l + p_r
    plane = pl.program_id(0)

    def copy_band(in_start, out_start, nrows):
        tb = min(th, nrows)                # static
        n_tiles = -(-nrows // tb)          # static ceil-div

        def body(j, carry):
            # Clamp the last (possibly partial) tile; the overlap rewrites
            # identical data, which is harmless.
            r0 = jnp.minimum(j * tb, nrows - tb)
            pltpu.sync_copy(x_hbm.at[plane, pl.ds(in_start + r0, tb), :],
                            xbuf.at[0:tb, :])
            obuf[0:tb, p_l:p_l + W] = xbuf[0:tb, :]
            if p_l:
                obuf[0:tb, 0:p_l] = xbuf[0:tb, W - p_l:W]
            if p_r:
                obuf[0:tb, p_l + W:Wo] = xbuf[0:tb, 0:p_r]
            pltpu.sync_copy(obuf.at[0:tb, :],
                            o_hbm.at[plane, pl.ds(out_start + r0, tb), :])
            return carry

        jax.lax.fori_loop(0, n_tiles, body, 0)

    copy_band(0, p_t, H)                 # interior rows
    if p_t:
        copy_band(H - p_t, 0, p_t)       # top halo <- wrapped bottom rows
    if p_b:
        copy_band(0, p_t + H, p_b)       # bottom halo <- wrapped top rows


def circular_pad(x, padding=(1, 1, 1, 1), *, _force_h_tiled=False):
    """Equivalent of F.pad(x, pad=padding, mode='circular') for 4D NCHW input."""
    p_l, p_r, p_t, p_b = (int(p) for p in padding)
    if min(p_l, p_r, p_t, p_b) < 0:
        raise ValueError("negative padding is not supported")
    N, C, H, W = x.shape
    if p_t > H or p_b > H or p_l > W or p_r > W:
        # Match torch: circular padding must not exceed the corresponding dim.
        raise ValueError("circular padding must not be larger than the input size")

    Ho = H + p_t + p_b
    Wo = W + p_l + p_r
    NC = N * C
    x3 = x.reshape(NC, H, W)  # free view: collapse N, C into one plane axis
    itemsize = jnp.dtype(x.dtype).itemsize
    pad = (p_l, p_r, p_t, p_b)

    pair_budget, vmem_limit = _vmem_plan()
    sub = _sublane_multiple(itemsize)
    in_plane = _round_up(H, sub) * _round_up(W, 128) * itemsize
    out_plane = _round_up(Ho, sub) * _round_up(Wo, 128) * itemsize
    pair_bytes = in_plane + out_plane

    if _force_h_tiled or pair_bytes > pair_budget:
        # A single (in+out) plane pair does not fit the per-step VMEM budget
        # (or forced for testing): manual H-tiled path, planes stay in HBM.
        th = _choose_row_tile(H, W, Wo, itemsize, pair_budget)
        kernel = functools.partial(_circular_pad_htiled_kernel,
                                   pad=pad, H=H, W=W, th=th)
        out3 = pl.pallas_call(
            kernel,
            out_shape=jax.ShapeDtypeStruct((NC, Ho, Wo), x.dtype),
            grid=(NC,),
            in_specs=[pl.BlockSpec(memory_space=pl.ANY)],
            out_specs=pl.BlockSpec(memory_space=pl.ANY),
            scratch_shapes=[
                pltpu.VMEM((th, W), x.dtype),
                pltpu.VMEM((th, Wo), x.dtype),
            ],
            compiler_params=pltpu.CompilerParams(
                dimension_semantics=("arbitrary",),
                vmem_limit_bytes=vmem_limit,
            ),
        )(x3)
        return out3.reshape(N, C, Ho, Wo)

    blk = _choose_plane_block(NC, pair_bytes, pair_budget)
    grid = (pl.cdiv(NC, blk),)
    kernel = functools.partial(_circular_pad_kernel, pad=pad)
    cost = pl.CostEstimate(flops=0, transcendentals=0,
                           bytes_accessed=NC * (H * W + Ho * Wo) * itemsize)

    out3 = pl.pallas_call(
        kernel,
        out_shape=jax.ShapeDtypeStruct((NC, Ho, Wo), x.dtype),
        grid=grid,
        in_specs=[pl.BlockSpec((blk, H, W), lambda i: (i, 0, 0))],
        out_specs=pl.BlockSpec((blk, Ho, Wo), lambda i: (i, 0, 0)),
        compiler_params=pltpu.CompilerParams(
            dimension_semantics=("parallel",),
            vmem_limit_bytes=vmem_limit,
        ),
        cost_estimate=cost,
    )(x3)
    return out3.reshape(N, C, Ho, Wo)


if __name__ == "__main__":
    key = jax.random.PRNGKey(0)
    x = jax.random.normal(key, (2, 4, 16, 16), dtype=jnp.float32)

    # Symmetric pads (matches the module's default).
    out = jax.block_until_ready(circular_pad(x, padding=(1, 1, 1, 1)))
    ref = jnp.pad(x, ((0, 0), (0, 0), (1, 1), (1, 1)), mode="wrap")
    assert out.shape == (2, 4, 18, 18)
    assert jnp.allclose(out, ref), "mismatch vs reference circular pad"

    # Asymmetric pads, exercises all halo/corner stores (p_t = 0 branch).
    out2 = jax.block_until_ready(circular_pad(x, padding=(2, 1, 0, 3)))
    ref2 = jnp.pad(x, ((0, 0), (0, 0), (0, 3), (2, 1)), mode="wrap")
    assert out2.shape == ref2.shape
    assert jnp.allclose(out2, ref2), "mismatch vs reference circular pad (asym)"

    # bf16: exercises dtype-aware sublane sizing; a pure copy must be bit-exact.
    xb = x.astype(jnp.bfloat16)
    outb = jax.block_until_ready(circular_pad(xb, padding=(1, 2, 2, 1)))
    refb = jnp.pad(xb, ((0, 0), (0, 0), (2, 1), (1, 2)), mode="wrap")
    assert outb.dtype == jnp.bfloat16 and jnp.array_equal(outb, refb), \
        "mismatch vs reference circular pad (bf16)"

    # Force the manual H-tiled fallback path (used for huge planes) and check it.
    out3 = jax.block_until_ready(
        circular_pad(x, padding=(2, 1, 3, 0), _force_h_tiled=True))
    ref3 = jnp.pad(x, ((0, 0), (0, 0), (3, 0), (2, 1)), mode="wrap")
    assert out3.shape == ref3.shape
    assert jnp.allclose(out3, ref3), "mismatch vs reference circular pad (h-tiled)"

    print("KERNEL_OK")
</pallas_src>

<mosaic_0001>
module attributes {stable_mosaic.version = 11 : i64} {
  func.func @_circular_pad_kernel(%arg0: i32, %arg1: memref<8x16x16xf32, #tpu.memory_space<vmem>>, %arg2: memref<8x18x18xf32, #tpu.memory_space<vmem>>) attributes {dimension_semantics = [#tpu.dimension_semantics<parallel>], iteration_bounds = array<i64: 1>, scalar_prefetch = 0 : i64, scratch_operands = 0 : i64, tpu.core_type = #tpu.core_type<tc>, window_params = [{transform_indices = @transform_0, window_bounds = array<i64: 8, 16, 16>}, {transform_indices = @transform_1, window_bounds = array<i64: 8, 18, 18>}]} {
    %c0 = arith.constant 0 : index
    %c0_0 = arith.constant 0 : index
    %c0_1 = arith.constant 0 : index
    %0 = vector.load %arg1[%c0, %c0_0, %c0_1] : memref<8x16x16xf32, #tpu.memory_space<vmem>>, vector<8x16x16xf32>
    %c0_2 = arith.constant 0 : index
    %c1 = arith.constant 1 : index
    %c1_3 = arith.constant 1 : index
    %1 = vector.load %arg2[%c0_2, %c1, %c1_3] : memref<8x18x18xf32, #tpu.memory_space<vmem>>, vector<8x16x16xf32>
    tpu.vector_store %arg2[%c0_2, %c1, %c1_3], %0 {strides = array<i32>} : memref<8x18x18xf32, #tpu.memory_space<vmem>>, vector<8x16x16xf32>,
    %c0_4 = arith.constant 0 : index
    %c15 = arith.constant 15 : index
    %c0_5 = arith.constant 0 : index
    %2 = vector.load %arg1[%c0_4, %c15, %c0_5] : memref<8x16x16xf32, #tpu.memory_space<vmem>>, vector<8x1x16xf32>
    %c0_6 = arith.constant 0 : index
    %c0_7 = arith.constant 0 : index
    %c1_8 = arith.constant 1 : index
    %3 = vector.load %arg2[%c0_6, %c0_7, %c1_8] : memref<8x18x18xf32, #tpu.memory_space<vmem>>, vector<8x1x16xf32>
    tpu.vector_store %arg2[%c0_6, %c0_7, %c1_8], %2 {strides = array<i32>} : memref<8x18x18xf32, #tpu.memory_space<vmem>>, vector<8x1x16xf32>,
    %c0_9 = arith.constant 0 : index
    %c0_10 = arith.constant 0 : index
    %c0_11 = arith.constant 0 : index
    %4 = vector.load %arg1[%c0_9, %c0_10, %c0_11] : memref<8x16x16xf32, #tpu.memory_space<vmem>>, vector<8x1x16xf32>
    %c0_12 = arith.constant 0 : index
    %c17 = arith.constant 17 : index
    %c1_13 = arith.constant 1 : index
    %5 = vector.load %arg2[%c0_12, %c17, %c1_13] : memref<8x18x18xf32, #tpu.memory_space<vmem>>, vector<8x1x16xf32>
    tpu.vector_store %arg2[%c0_12, %c17, %c1_13], %4 {strides = array<i32>} : memref<8x18x18xf32, #tpu.memory_space<vmem>>, vector<8x1x16xf32>,
    %c0_14 = arith.constant 0 : index
    %c0_15 = arith.constant 0 : index
    %c15_16 = arith.constant 15 : index
    %6 = vector.load %arg1[%c0_14, %c0_15, %c15_16] : memref<8x16x16xf32, #tpu.memory_space<vmem>>, vector<8x16x1xf32>
    %c0_17 = arith.constant 0 : index
    %c1_18 = arith.constant 1 : index
    %c0_19 = arith.constant 0 : index
    %7 = vector.load %arg2[%c0_17, %c1_18, %c0_19] : memref<8x18x18xf32, #tpu.memory_space<vmem>>, vector<8x16x1xf32>
    tpu.vector_store %arg2[%c0_17, %c1_18, %c0_19], %6 {strides = array<i32>} : memref<8x18x18xf32, #tpu.memory_space<vmem>>, vector<8x16x1xf32>,
    %c0_20 = arith.constant 0 : index
    %c0_21 = arith.constant 0 : index
    %c0_22 = arith.constant 0 : index
    %8 = vector.load %arg1[%c0_20, %c0_21, %c0_22] : memref<8x16x16xf32, #tpu.memory_space<vmem>>, vector<8x16x1xf32>
    %c0_23 = arith.constant 0 : index
    %c1_24 = arith.constant 1 : index
    %c17_25 = arith.constant 17 : index
    %9 = vector.load %arg2[%c0_23, %c1_24, %c17_25] : memref<8x18x18xf32, #tpu.memory_space<vmem>>, vector<8x16x1xf32>
    tpu.vector_store %arg2[%c0_23, %c1_24, %c17_25], %8 {strides = array<i32>} : memref<8x18x18xf32, #tpu.memory_space<vmem>>, vector<8x16x1xf32>,
    %c0_26 = arith.constant 0 : index
    %c15_27 = arith.constant 15 : index
    %c15_28 = arith.constant 15 : index
    %10 = vector.load %arg1[%c0_26, %c15_27, %c15_28] : memref<8x16x16xf32, #tpu.memory_space<vmem>>, vector<8x1x1xf32>
    %c0_29 = arith.constant 0 : index
    %c0_30 = arith.constant 0 : index
    %c0_31 = arith.constant 0 : index
    %11 = vector.load %arg2[%c0_29, %c0_30, %c0_31] : memref<8x18x18xf32, #tpu.memory_space<vmem>>, vector<8x1x1xf32>
    tpu.vector_store %arg2[%c0_29, %c0_30, %c0_31], %10 {strides = array<i32>} : memref<8x18x18xf32, #tpu.memory_space<vmem>>, vector<8x1x1xf32>,
    %c0_32 = arith.constant 0 : index
    %c15_33 = arith.constant 15 : index
    %c0_34 = arith.constant 0 : index
    %12 = vector.load %arg1[%c0_32, %c15_33, %c0_34] : memref<8x16x16xf32, #tpu.memory_space<vmem>>, vector<8x1x1xf32>
    %c0_35 = arith.constant 0 : index
    %c0_36 = arith.constant 0 : index
    %c17_37 = arith.constant 17 : index
    %13 = vector.load %arg2[%c0_35, %c0_36, %c17_37] : memref<8x18x18xf32, #tpu.memory_space<vmem>>, vector<8x1x1xf32>
    tpu.vector_store %arg2[%c0_35, %c0_36, %c17_37], %12 {strides = array<i32>} : memref<8x18x18xf32, #tpu.memory_space<vmem>>, vector<8x1x1xf32>,
    %c0_38 = arith.constant 0 : index
    %c0_39 = arith.constant 0 : index
    %c15_40 = arith.constant 15 : index
    %14 = vector.load %arg1[%c0_38, %c0_39, %c15_40] : memref<8x16x16xf32, #tpu.memory_space<vmem>>, vector<8x1x1xf32>
    %c0_41 = arith.constant 0 : index
    %c17_42 = arith.constant 17 : index
    %c0_43 = arith.constant 0 : index
    %15 = vector.load %arg2[%c0_41, %c17_42, %c0_43] : memref<8x18x18xf32, #tpu.memory_space<vmem>>, vector<8x1x1xf32>
    tpu.vector_store %arg2[%c0_41, %c17_42, %c0_43], %14 {strides = array<i32>} : memref<8x18x18xf32, #tpu.memory_space<vmem>>, vector<8x1x1xf32>,
    %c0_44 = arith.constant 0 : index
    %c0_45 = arith.constant 0 : index
    %c0_46 = arith.constant 0 : index
    %16 = vector.load %arg1[%c0_44, %c0_45, %c0_46] : memref<8x16x16xf32, #tpu.memory_space<vmem>>, vector<8x1x1xf32>
    %c0_47 = arith.constant 0 : index
    %c17_48 = arith.constant 17 : index
    %c17_49 = arith.constant 17 : index
    %17 = vector.load %arg2[%c0_47, %c17_48, %c17_49] : memref<8x18x18xf32, #tpu.memory_space<vmem>>, vector<8x1x1xf32>
    tpu.vector_store %arg2[%c0_47, %c17_48, %c17_49], %16 {strides = array<i32>} : memref<8x18x18xf32, #tpu.memory_space<vmem>>, vector<8x1x1xf32>,
    return
  }
  func.func @transform_0(%arg0: i32) -> (i32, i32, i32) {
    %c0_i32 = arith.constant 0 : i32
    %c0_i32_0 = arith.constant 0 : i32
    %c0_i32_1 = arith.constant 0 : i32
    return %arg0, %c0_i32, %c0_i32_0 : i32, i32, i32
  }
  func.func @transform_1(%arg0: i32) -> (i32, i32, i32) {
    %c0_i32 = arith.constant 0 : i32
    %c0_i32_0 = arith.constant 0 : i32
    %c0_i32_1 = arith.constant 0 : i32
    return %arg0, %c0_i32, %c0_i32_0 : i32, i32, i32
  }
}

</mosaic_0001>

<llo_original>
// kernel: tpu_custom_call.1
$region0: #{tpu_custom_call.1}
  #allocation0 [shape = 'u32[]', space=smem, size = 0x4, offset = 0x4, fixed_abs, tag = 'smem constant byte address 0x4 - core index']
  #allocation1 [shape = 'u32[144,128]{1,0:T(1,128)}', space=vmem, size = 0x12000, scoped, tag = 'internal scratch']
  %s0 = inlined_call_operand.hbm [shape: f32[8,16,16], index: 0, kind: input, shape index: {}]
  %s1 = inlined_call_operand.vmem [shape: f32[8,18,18], index: 1, kind: output, shape index: {}]
  %s2 = sld [smem:[#allocation0]]
  $region18: #{tpu_custom_call.1} parent=0
    _
  %s4 = ssub.s32 1, %s2
  %s5 = scalar_select 0, %s4, %s2
  $region1: #{tpu_custom_call.1} parent=0
    #allocation2 [shape = 'u8[65536]{0}', space=vmem, size = 0x10000, scoped, tag = 'input window, operand 0, single buffered']
    #allocation3 [shape = 's32[1]{0}', space=sflag, size = 0x4, scoped, tag = 'scoped memory for tpu_custom_call.1']
    %6 = vsyncpa [#allocation3], 0
    // Predicated region
    $region2: #{tpu_custom_call.1} parent=1 // pred_check
      _
    $region3: #{tpu_custom_call.1} parent=1 // pred_check_branch
      %8 = sbr.rel (0) target = $region5
    $region4: #{tpu_custom_call.1} parent=1 // pred_region
      %s10 = ssub.s32 2048, 2048
      %11 = vsyncadd [#allocation3], %s10
      %s12 = sshll.u32 [#allocation2], 4
      %s13 = int_to_ptr.vmem [resolvable:$true] %s12
      %18 = dma.hbm_to_vmem [thread:$0]  %s0, 2048, %s13, [#allocation3], 128, 128, 8
    $region5: #{tpu_custom_call.1} parent=1 // pred_fallthru
      _
    // Predicated region
    $region6: #{tpu_custom_call.1} parent=1 // pred_check
      _
    $region7: #{tpu_custom_call.1} parent=1 // pred_check_branch
      %20 = sbr.rel (0) target = $region9
    $region8: #{tpu_custom_call.1} parent=1 // pred_region
      %21 = dma.done [#allocation3], 2048
    $region9: #{tpu_custom_call.1} parent=1 // pred_fallthru
      _
    %v22 = vld [vmem:[#allocation2] sm:$0xff]
    %v23 = vld [vmem:[#allocation2 + $0x8] sm:$0xff]
    %v24 = vld [vmem:[#allocation2 + $0x10] sm:$0xff]
    %v25 = vld [vmem:[#allocation2 + $0x18] sm:$0xff]
    %v26 = vld [vmem:[#allocation2 + $0x20] sm:$0xff]
    %v27 = vld [vmem:[#allocation2 + $0x28] sm:$0xff]
    %v28 = vld [vmem:[#allocation2 + $0x30] sm:$0xff]
    %v29 = vld [vmem:[#allocation2 + $0x38] sm:$0xff]
    %v30 = vld [vmem:[#allocation2 + $0x40] sm:$0xff]
    %v31 = vld [vmem:[#allocation2 + $0x48] sm:$0xff]
    %v32 = vld [vmem:[#allocation2 + $0x50] sm:$0xff]
    %v33 = vld [vmem:[#allocation2 + $0x58] sm:$0xff]
    %v34 = vld [vmem:[#allocation2 + $0x60] sm:$0xff]
    %v35 = vld [vmem:[#allocation2 + $0x68] sm:$0xff]
    %v36 = vld [vmem:[#allocation2 + $0x70] sm:$0xff]
    %v37 = vld [vmem:[#allocation2 + $0x78] sm:$0xff]
    %54 = vrot.lane.b32.xlu0 %v22, 1
    %v55 = vpop.permute.xlu0 %54
    %56 = vrot.lane.b32.xlu0 %v23, 1
    %v57 = vpop.permute.xlu0 %56
    %58 = vrot.lane.b32.xlu0 %v24, 1
    %v59 = vpop.permute.xlu0 %58
    %60 = vrot.lane.b32.xlu0 %v25, 1
    %v61 = vpop.permute.xlu0 %60
    %62 = vrot.lane.b32.xlu0 %v26, 1
    %v63 = vpop.permute.xlu0 %62
    %64 = vrot.lane.b32.xlu0 %v27, 1
    %v65 = vpop.permute.xlu0 %64
    %66 = vrot.lane.b32.xlu0 %v28, 1
    %v67 = vpop.permute.xlu0 %66
    %68 = vrot.lane.b32.xlu0 %v29, 1
    %v69 = vpop.permute.xlu0 %68
    %70 = vrot.lane.b32.xlu0 %v30, 1
    %v71 = vpop.permute.xlu0 %70
    %72 = vrot.lane.b32.xlu0 %v31, 1
    %v73 = vpop.permute.xlu0 %72
    %74 = vrot.lane.b32.xlu0 %v32, 1
    %v75 = vpop.permute.xlu0 %74
    %76 = vrot.lane.b32.xlu0 %v33, 1
    %v77 = vpop.permute.xlu0 %76
    %78 = vrot.lane.b32.xlu0 %v34, 1
    %v79 = vpop.permute.xlu0 %78
    %80 = vrot.lane.b32.xlu0 %v35, 1
    %v81 = vpop.permute.xlu0 %80
    %82 = vrot.lane.b32.xlu0 %v36, 1
    %v83 = vpop.permute.xlu0 %82
    %84 = vrot.lane.b32.xlu0 %v37, 1
    %v85 = vpop.permute.xlu0 %84
    %vm102 = vcmask 138248
    %103 = vst.msk [vmem:[%s1 + $0x1] sm:$0xff] %vm102, %v55
    %104 = vst.msk [vmem:[%s1 + $0x9] sm:$0xff] %vm102, %v57
    %105 = vst.msk [vmem:[%s1 + $0x19] sm:$0xff] %vm102, %v59
    %106 = vst.msk [vmem:[%s1 + $0x21] sm:$0xff] %vm102, %v61
    %107 = vst.msk [vmem:[%s1 + $0x31] sm:$0xff] %vm102, %v63
    %108 = vst.msk [vmem:[%s1 + $0x39] sm:$0xff] %vm102, %v65
    %109 = vst.msk [vmem:[%s1 + $0x49] sm:$0xff] %vm102, %v67
    %110 = vst.msk [vmem:[%s1 + $0x51] sm:$0xff] %vm102, %v69
    %111 = vst.msk [vmem:[%s1 + $0x61] sm:$0xff] %vm102, %v71
    %112 = vst.msk [vmem:[%s1 + $0x69] sm:$0xff] %vm102, %v73
    %113 = vst.msk [vmem:[%s1 + $0x79] sm:$0xff] %vm102, %v75
    %114 = vst.msk [vmem:[%s1 + $0x81] sm:$0xff] %vm102, %v77
    %115 = vst.msk [vmem:[%s1 + $0x91] sm:$0xff] %vm102, %v79
    %116 = vst.msk [vmem:[%s1 + $0x99] sm:$0xff] %vm102, %v81
    %117 = vst.msk [vmem:[%s1 + $0xa9] sm:$0xff] %vm102, %v83
    %118 = vst.msk [vmem:[%s1 + $0xb1] sm:$0xff] %vm102, %v85
    %v119 = vld [vmem:[#allocation2 + $0xf] sm:$0x1]
    %v120 = vld [vmem:[#allocation2 + $0x1f] sm:$0x1]
    %v121 = vld [vmem:[#allocation2 + $0x2f] sm:$0x1]
    %v122 = vld [vmem:[#allocation2 + $0x3f] sm:$0x1]
    %v123 = vld [vmem:[#allocation2 + $0x4f] sm:$0x1]
    %v124 = vld [vmem:[#allocation2 + $0x5f] sm:$0x1]
    %v125 = vld [vmem:[#allocation2 + $0x6f] sm:$0x1]
    %v126 = vld [vmem:[#allocation2 + $0x7f] sm:$0x1]
    %135 = vrot.lane.b32.xlu0 %v119, 1
    %v136 = vpop.permute.xlu0 %135
    %137 = vrot.lane.b32.xlu0 %v120, 1
    %v138 = vpop.permute.xlu0 %137
    %139 = vrot.lane.b32.xlu0 %v121, 1
    %v140 = vpop.permute.xlu0 %139
    %141 = vrot.lane.b32.xlu0 %v122, 1
    %v142 = vpop.permute.xlu0 %141
    %143 = vrot.lane.b32.xlu0 %v123, 1
    %v144 = vpop.permute.xlu0 %143
    %145 = vrot.lane.b32.xlu0 %v124, 1
    %v146 = vpop.permute.xlu0 %145
    %147 = vrot.lane.b32.xlu0 %v125, 1
    %v148 = vpop.permute.xlu0 %147
    %149 = vrot.lane.b32.xlu0 %v126, 1
    %v150 = vpop.permute.xlu0 %149
    %vm159 = vcmask 131080
    %160 = vst.msk [vmem:[%s1] sm:$0x1] %vm159, %v136
    %161 = vst.msk [vmem:[%s1 + $0x18] sm:$0x1] %vm159, %v138
    %162 = vst.msk [vmem:[%s1 + $0x30] sm:$0x1] %vm159, %v140
    %163 = vst.msk [vmem:[%s1 + $0x48] sm:$0x1] %vm159, %v142
    %164 = vst.msk [vmem:[%s1 + $0x60] sm:$0x1] %vm159, %v144
    %165 = vst.msk [vmem:[%s1 + $0x78] sm:$0x1] %vm159, %v146
    %166 = vst.msk [vmem:[%s1 + $0x90] sm:$0x1] %vm159, %v148
    %167 = vst.msk [vmem:[%s1 + $0xa8] sm:$0x1] %vm159, %v150
    %v168 = vld [vmem:[#allocation2] sm:$0x1]
    %v169 = vld [vmem:[#allocation2 + $0x10] sm:$0x1]
    %v170 = vld [vmem:[#allocation2 + $0x20] sm:$0x1]
    %v171 = vld [vmem:[#allocation2 + $0x30] sm:$0x1]
    %v172 = vld [vmem:[#allocation2 + $0x40] sm:$0x1]
    %v173 = vld [vmem:[#allocation2 + $0x50] sm:$0x1]
    %v174 = vld [vmem:[#allocation2 + $0x60] sm:$0x1]
    %v175 = vld [vmem:[#allocation2 + $0x70] sm:$0x1]
    %184 = vrot.lane.b32.xlu0 %v168, 1
    %v185 = vpop.permute.xlu0 %184
    %186 = vrot.lane.b32.xlu0 %v169, 1
    %v187 = vpop.permute.xlu0 %186
    %188 = vrot.lane.b32.xlu0 %v170, 1
    %v189 = vpop.permute.xlu0 %188
    %190 = vrot.lane.b32.xlu0 %v171, 1
    %v191 = vpop.permute.xlu0 %190
    %192 = vrot.lane.b32.xlu0 %v172, 1
    %v193 = vpop.permute.xlu0 %192
    %194 = vrot.lane.b32.xlu0 %v173, 1
    %v195 = vpop.permute.xlu0 %194
    %196 = vrot.lane.b32.xlu0 %v174, 1
    %v197 = vpop.permute.xlu0 %196
    %198 = vrot.lane.b32.xlu0 %v175, 1
    %v199 = vpop.permute.xlu0 %198
    %208 = vst.msk [vmem:[%s1 + $0x11] sm:$0x1] %vm159, %v185
    %209 = vst.msk [vmem:[%s1 + $0x29] sm:$0x1] %vm159, %v187
    %210 = vst.msk [vmem:[%s1 + $0x41] sm:$0x1] %vm159, %v189
    %211 = vst.msk [vmem:[%s1 + $0x59] sm:$0x1] %vm159, %v191
    %212 = vst.msk [vmem:[%s1 + $0x71] sm:$0x1] %vm159, %v193
    %213 = vst.msk [vmem:[%s1 + $0x89] sm:$0x1] %vm159, %v195
    %214 = vst.msk [vmem:[%s1 + $0xa1] sm:$0x1] %vm159, %v197
    %215 = vst.msk [vmem:[%s1 + $0xb9] sm:$0x1] %vm159, %v199
    %v216 = vld [vmem:[#allocation2] sm:$0xff]
    %v217 = vld [vmem:[#allocation2 + $0x8] sm:$0xff]
    %v218 = vld [vmem:[#allocation2 + $0x10] sm:$0xff]
    %v219 = vld [vmem:[#allocation2 + $0x18] sm:$0xff]
    %v220 = vld [vmem:[#allocation2 + $0x20] sm:$0xff]
    %v221 = vld [vmem:[#allocation2 + $0x28] sm:$0xff]
    %v222 = vld [vmem:[#allocation2 + $0x30] sm:$0xff]
    %v223 = vld [vmem:[#allocation2 + $0x38] sm:$0xff]
    %v224 = vld [vmem:[#allocation2 + $0x40] sm:$0xff]
    %v225 = vld [vmem:[#allocation2 + $0x48] sm:$0xff]
    %v226 = vld [vmem:[#allocation2 + $0x50] sm:$0xff]
    %v227 = vld [vmem:[#allocation2 + $0x58] sm:$0xff]
    %v228 = vld [vmem:[#allocation2 + $0x60] sm:$0xff]
    %v229 = vld [vmem:[#allocation2 + $0x68] sm:$0xff]
    %v230 = vld [vmem:[#allocation2 + $0x70] sm:$0xff]
    %v231 = vld [vmem:[#allocation2 + $0x78] sm:$0xff]
    %248 = vrot.lane.b32.xlu0 %v216, 113
    %v249 = vpop.permute.xlu0 %248
    %250 = vrot.lane.b32.xlu0 %v217, 113
    %v251 = vpop.permute.xlu0 %250
    %252 = vrot.lane.b32.xlu0 %v218, 113
    %v253 = vpop.permute.xlu0 %252
    %254 = vrot.lane.b32.xlu0 %v219, 113
    %v255 = vpop.permute.xlu0 %254
    %256 = vrot.lane.b32.xlu0 %v220, 113
    %v257 = vpop.permute.xlu0 %256
    %258 = vrot.lane.b32.xlu0 %v221, 113
    %v259 = vpop.permute.xlu0 %258
    %260 = vrot.lane.b32.xlu0 %v222, 113
    %v261 = vpop.permute.xlu0 %260
    %262 = vrot.lane.b32.xlu0 %v223, 113
    %v263 = vpop.permute.xlu0 %262
    %264 = vrot.lane.b32.xlu0 %v224, 113
    %v265 = vpop.permute.xlu0 %264
    %266 = vrot.lane.b32.xlu0 %v225, 113
    %v267 = vpop.permute.xlu0 %266
    %268 = vrot.lane.b32.xlu0 %v226, 113
    %v269 = vpop.permute.xlu0 %268
    %270 = vrot.lane.b32.xlu0 %v227, 113
    %v271 = vpop.permute.xlu0 %270
    %272 = vrot.lane.b32.xlu0 %v228, 113
    %v273 = vpop.permute.xlu0 %272
    %274 = vrot.lane.b32.xlu0 %v229, 113
    %v275 = vpop.permute.xlu0 %274
    %276 = vrot.lane.b32.xlu0 %v230, 113
    %v277 = vpop.permute.xlu0 %276
    %278 = vrot.lane.b32.xlu0 %v231, 113
    %v279 = vpop.permute.xlu0 %278
    %vm296 = vcmask 7168
    %297 = vst.msk [vmem:[%s1 + $0x1] sm:$0xff] %vm296, %v249
    %298 = vst.msk [vmem:[%s1 + $0x9] sm:$0xff] %vm296, %v251
    %299 = vst.msk [vmem:[%s1 + $0x19] sm:$0xff] %vm296, %v253
    %300 = vst.msk [vmem:[%s1 + $0x21] sm:$0xff] %vm296, %v255
    %301 = vst.msk [vmem:[%s1 + $0x31] sm:$0xff] %vm296, %v257
    %302 = vst.msk [vmem:[%s1 + $0x39] sm:$0xff] %vm296, %v259
    %303 = vst.msk [vmem:[%s1 + $0x49] sm:$0xff] %vm296, %v261
    %304 = vst.msk [vmem:[%s1 + $0x51] sm:$0xff] %vm296, %v263
    %305 = vst.msk [vmem:[%s1 + $0x61] sm:$0xff] %vm296, %v265
    %306 = vst.msk [vmem:[%s1 + $0x69] sm:$0xff] %vm296, %v267
    %307 = vst.msk [vmem:[%s1 + $0x79] sm:$0xff] %vm296, %v269
    %308 = vst.msk [vmem:[%s1 + $0x81] sm:$0xff] %vm296, %v271
    %309 = vst.msk [vmem:[%s1 + $0x91] sm:$0xff] %vm296, %v273
    %310 = vst.msk [vmem:[%s1 + $0x99] sm:$0xff] %vm296, %v275
    %311 = vst.msk [vmem:[%s1 + $0xa9] sm:$0xff] %vm296, %v277
    %312 = vst.msk [vmem:[%s1 + $0xb1] sm:$0xff] %vm296, %v279
    %v313 = vld [vmem:[#allocation2] sm:$0xff]
    %v314 = vld [vmem:[#allocation2 + $0x8] sm:$0xff]
    %v315 = vld [vmem:[#allocation2 + $0x10] sm:$0xff]
    %v316 = vld [vmem:[#allocation2 + $0x18] sm:$0xff]
    %v317 = vld [vmem:[#allocation2 + $0x20] sm:$0xff]
    %v318 = vld [vmem:[#allocation2 + $0x28] sm:$0xff]
    %v319 = vld [vmem:[#allocation2 + $0x30] sm:$0xff]
    %v320 = vld [vmem:[#allocation2 + $0x38] sm:$0xff]
    %v321 = vld [vmem:[#allocation2 + $0x40] sm:$0xff]
    %v322 = vld [vmem:[#allocation2 + $0x48] sm:$0xff]
    %v323 = vld [vmem:[#allocation2 + $0x50] sm:$0xff]
    %v324 = vld [vmem:[#allocation2 + $0x58] sm:$0xff]
    %v325 = vld [vmem:[#allocation2 + $0x60] sm:$0xff]
    %v326 = vld [vmem:[#allocation2 + $0x68] sm:$0xff]
    %v327 = vld [vmem:[#allocation2 + $0x70] sm:$0xff]
    %v328 = vld [vmem:[#allocation2 + $0x78] sm:$0xff]
    %345 = vrot.lane.b32.xlu0 %v313, 17
    %v346 = vpop.permute.xlu0 %345
    %347 = vrot.lane.b32.xlu0 %v314, 17
    %v348 = vpop.permute.xlu0 %347
    %349 = vrot.lane.b32.xlu0 %v315, 17
    %v350 = vpop.permute.xlu0 %349
    %351 = vrot.lane.b32.xlu0 %v316, 17
    %v352 = vpop.permute.xlu0 %351
    %353 = vrot.lane.b32.xlu0 %v317, 17
    %v354 = vpop.permute.xlu0 %353
    %355 = vrot.lane.b32.xlu0 %v318, 17
    %v356 = vpop.permute.xlu0 %355
    %357 = vrot.lane.b32.xlu0 %v319, 17
    %v358 = vpop.permute.xlu0 %357
    %359 = vrot.lane.b32.xlu0 %v320, 17
    %v360 = vpop.permute.xlu0 %359
    %361 = vrot.lane.b32.xlu0 %v321, 17
    %v362 = vpop.permute.xlu0 %361
    %363 = vrot.lane.b32.xlu0 %v322, 17
    %v364 = vpop.permute.xlu0 %363
    %365 = vrot.lane.b32.xlu0 %v323, 17
    %v366 = vpop.permute.xlu0 %365
    %367 = vrot.lane.b32.xlu0 %v324, 17
    %v368 = vpop.permute.xlu0 %367
    %369 = vrot.lane.b32.xlu0 %v325, 17
    %v370 = vpop.permute.xlu0 %369
    %371 = vrot.lane.b32.xlu0 %v326, 17
    %v372 = vpop.permute.xlu0 %371
    %373 = vrot.lane.b32.xlu0 %v327, 17
    %v374 = vpop.permute.xlu0 %373
    %375 = vrot.lane.b32.xlu0 %v328, 17
    %v376 = vpop.permute.xlu0 %375
    %vm393 = vcmask 146568
    %394 = vst.msk [vmem:[%s1 + $0x1] sm:$0xff] %vm393, %v346
    %395 = vst.msk [vmem:[%s1 + $0x9] sm:$0xff] %vm393, %v348
    %396 = vst.msk [vmem:[%s1 + $0x19] sm:$0xff] %vm393, %v350
    %397 = vst.msk [vmem:[%s1 + $0x21] sm:$0xff] %vm393, %v352
    %398 = vst.msk [vmem:[%s1 + $0x31] sm:$0xff] %vm393, %v354
    %399 = vst.msk [vmem:[%s1 + $0x39] sm:$0xff] %vm393, %v356
    %400 = vst.msk [vmem:[%s1 + $0x49] sm:$0xff] %vm393, %v358
    %401 = vst.msk [vmem:[%s1 + $0x51] sm:$0xff] %vm393, %v360
    %402 = vst.msk [vmem:[%s1 + $0x61] sm:$0xff] %vm393, %v362
    %403 = vst.msk [vmem:[%s1 + $0x69] sm:$0xff] %vm393, %v364
    %404 = vst.msk [vmem:[%s1 + $0x79] sm:$0xff] %vm393, %v366
    %405 = vst.msk [vmem:[%s1 + $0x81] sm:$0xff] %vm393, %v368
    %406 = vst.msk [vmem:[%s1 + $0x91] sm:$0xff] %vm393, %v370
    %407 = vst.msk [vmem:[%s1 + $0x99] sm:$0xff] %vm393, %v372
    %408 = vst.msk [vmem:[%s1 + $0xa9] sm:$0xff] %vm393, %v374
    %409 = vst.msk [vmem:[%s1 + $0xb1] sm:$0xff] %vm393, %v376
    %v410 = vld [vmem:[#allocation2 + $0xf] sm:$0x1]
    %v411 = vld [vmem:[#allocation2 + $0x1f] sm:$0x1]
    %v412 = vld [vmem:[#allocation2 + $0x2f] sm:$0x1]
    %v413 = vld [vmem:[#allocation2 + $0x3f] sm:$0x1]
    %v414 = vld [vmem:[#allocation2 + $0x4f] sm:$0x1]
    %v415 = vld [vmem:[#allocation2 + $0x5f] sm:$0x1]
    %v416 = vld [vmem:[#allocation2 + $0x6f] sm:$0x1]
    %v417 = vld [vmem:[#allocation2 + $0x7f] sm:$0x1]
    %426 = vrot.lane.b32.xlu0 %v410, 113
    %v427 = vpop.permute.xlu0 %426
    %428 = vrot.lane.b32.xlu0 %v411, 113
    %v429 = vpop.permute.xlu0 %428
    %430 = vrot.lane.b32.xlu0 %v412, 113
    %v431 = vpop.permute.xlu0 %430
    %432 = vrot.lane.b32.xlu0 %v413, 113
    %v433 = vpop.permute.xlu0 %432
    %434 = vrot.lane.b32.xlu0 %v414, 113
    %v435 = vpop.permute.xlu0 %434
    %436 = vrot.lane.b32.xlu0 %v415, 113
    %v437 = vpop.permute.xlu0 %436
    %438 = vrot.lane.b32.xlu0 %v416, 113
    %v439 = vpop.permute.xlu0 %438
    %440 = vrot.lane.b32.xlu0 %v417, 113
    %v441 = vpop.permute.xlu0 %440
    %vm450 = vcmask 0
    %451 = vst.msk [vmem:[%s1] sm:$0x1] %vm450, %v427
    %452 = vst.msk [vmem:[%s1 + $0x18] sm:$0x1] %vm450, %v429
    %453 = vst.msk [vmem:[%s1 + $0x30] sm:$0x1] %vm450, %v431
    %454 = vst.msk [vmem:[%s1 + $0x48] sm:$0x1] %vm450, %v433
    %455 = vst.msk [vmem:[%s1 + $0x60] sm:$0x1] %vm450, %v435
    %456 = vst.msk [vmem:[%s1 + $0x78] sm:$0x1] %vm450, %v437
    %457 = vst.msk [vmem:[%s1 + $0x90] sm:$0x1] %vm450, %v439
    %458 = vst.msk [vmem:[%s1 + $0xa8] sm:$0x1] %vm450, %v441
    %v459 = vld [vmem:[#allocation2 + $0xf] sm:$0x1]
    %v460 = vld [vmem:[#allocation2 + $0x1f] sm:$0x1]
    %v461 = vld [vmem:[#allocation2 + $0x2f] sm:$0x1]
    %v462 = vld [vmem:[#allocation2 + $0x3f] sm:$0x1]
    %v463 = vld [vmem:[#allocation2 + $0x4f] sm:$0x1]
    %v464 = vld [vmem:[#allocation2 + $0x5f] sm:$0x1]
    %v465 = vld [vmem:[#allocation2 + $0x6f] sm:$0x1]
    %v466 = vld [vmem:[#allocation2 + $0x7f] sm:$0x1]
    %475 = vrot.lane.b32.xlu0 %v459, 17
    %v476 = vpop.permute.xlu0 %475
    %477 = vrot.lane.b32.xlu0 %v460, 17
    %v478 = vpop.permute.xlu0 %477
    %479 = vrot.lane.b32.xlu0 %v461, 17
    %v480 = vpop.permute.xlu0 %479
    %481 = vrot.lane.b32.xlu0 %v462, 17
    %v482 = vpop.permute.xlu0 %481
    %483 = vrot.lane.b32.xlu0 %v463, 17
    %v484 = vpop.permute.xlu0 %483
    %485 = vrot.lane.b32.xlu0 %v464, 17
    %v486 = vpop.permute.xlu0 %485
    %487 = vrot.lane.b32.xlu0 %v465, 17
    %v488 = vpop.permute.xlu0 %487
    %489 = vrot.lane.b32.xlu0 %v466, 17
    %v490 = vpop.permute.xlu0 %489
    %vm499 = vcmask 139400
    %500 = vst.msk [vmem:[%s1] sm:$0x1] %vm499, %v476
    %501 = vst.msk [vmem:[%s1 + $0x18] sm:$0x1] %vm499, %v478
    %502 = vst.msk [vmem:[%s1 + $0x30] sm:$0x1] %vm499, %v480
    %503 = vst.msk [vmem:[%s1 + $0x48] sm:$0x1] %vm499, %v482
    %504 = vst.msk [vmem:[%s1 + $0x60] sm:$0x1] %vm499, %v484
    %505 = vst.msk [vmem:[%s1 + $0x78] sm:$0x1] %vm499, %v486
    %506 = vst.msk [vmem:[%s1 + $0x90] sm:$0x1] %vm499, %v488
    %507 = vst.msk [vmem:[%s1 + $0xa8] sm:$0x1] %vm499, %v490
    %v508 = vld [vmem:[#allocation2] sm:$0x1]
    %v509 = vld [vmem:[#allocation2 + $0x10] sm:$0x1]
    %v510 = vld [vmem:[#allocation2 + $0x20] sm:$0x1]
    %v511 = vld [vmem:[#allocation2 + $0x30] sm:$0x1]
    %v512 = vld [vmem:[#allocation2 + $0x40] sm:$0x1]
    %v513 = vld [vmem:[#allocation2 + $0x50] sm:$0x1]
    %v514 = vld [vmem:[#allocation2 + $0x60] sm:$0x1]
    %v515 = vld [vmem:[#allocation2 + $0x70] sm:$0x1]
    %524 = vrot.lane.b32.xlu0 %v508, 113
    %v525 = vpop.permute.xlu0 %524
    %526 = vrot.lane.b32.xlu0 %v509, 113
    %v527 = vpop.permute.xlu0 %526
    %528 = vrot.lane.b32.xlu0 %v510, 113
    %v529 = vpop.permute.xlu0 %528
    %530 = vrot.lane.b32.xlu0 %v511, 113
    %v531 = vpop.permute.xlu0 %530
    %532 = vrot.lane.b32.xlu0 %v512, 113
    %v533 = vpop.permute.xlu0 %532
    %534 = vrot.lane.b32.xlu0 %v513, 113
    %v535 = vpop.permute.xlu0 %534
    %536 = vrot.lane.b32.xlu0 %v514, 113
    %v537 = vpop.permute.xlu0 %536
    %538 = vrot.lane.b32.xlu0 %v515, 113
    %v539 = vpop.permute.xlu0 %538
    %548 = vst.msk [vmem:[%s1 + $0x11] sm:$0x1] %vm450, %v525
    %549 = vst.msk [vmem:[%s1 + $0x29] sm:$0x1] %vm450, %v527
    %550 = vst.msk [vmem:[%s1 + $0x41] sm:$0x1] %vm450, %v529
    %551 = vst.msk [vmem:[%s1 + $0x59] sm:$0x1] %vm450, %v531
    %552 = vst.msk [vmem:[%s1 + $0x71] sm:$0x1] %vm450, %v533
    %553 = vst.msk [vmem:[%s1 + $0x89] sm:$0x1] %vm450, %v535
    %554 = vst.msk [vmem:[%s1 + $0xa1] sm:$0x1] %vm450, %v537
    %555 = vst.msk [vmem:[%s1 + $0xb9] sm:$0x1] %vm450, %v539
    %v556 = vld [vmem:[#allocation2] sm:$0x1]
    %v557 = vld [vmem:[#allocation2 + $0x10] sm:$0x1]
    %v558 = vld [vmem:[#allocation2 + $0x20] sm:$0x1]
    %v559 = vld [vmem:[#allocation2 + $0x30] sm:$0x1]
    %v560 = vld [vmem:[#allocation2 + $0x40] sm:$0x1]
    %v561 = vld [vmem:[#allocation2 + $0x50] sm:$0x1]
    %v562 = vld [vmem:[#allocation2 + $0x60] sm:$0x1]
    %v563 = vld [vmem:[#allocation2 + $0x70] sm:$0x1]
    %572 = vrot.lane.b32.xlu0 %v556, 17
    %v573 = vpop.permute.xlu0 %572
    %574 = vrot.lane.b32.xlu0 %v557, 17
    %v575 = vpop.permute.xlu0 %574
    %576 = vrot.lane.b32.xlu0 %v558, 17
    %v577 = vpop.permute.xlu0 %576
    %578 = vrot.lane.b32.xlu0 %v559, 17
    %v579 = vpop.permute.xlu0 %578
    %580 = vrot.lane.b32.xlu0 %v560, 17
    %v581 = vpop.permute.xlu0 %580
    %582 = vrot.lane.b32.xlu0 %v561, 17
    %v583 = vpop.permute.xlu0 %582
    %584 = vrot.lane.b32.xlu0 %v562, 17
    %v585 = vpop.permute.xlu0 %584
    %586 = vrot.lane.b32.xlu0 %v563, 17
    %v587 = vpop.permute.xlu0 %586
    %596 = vst.msk [vmem:[%s1 + $0x11] sm:$0x1] %vm499, %v573
    %597 = vst.msk [vmem:[%s1 + $0x29] sm:$0x1] %vm499, %v575
    %598 = vst.msk [vmem:[%s1 + $0x41] sm:$0x1] %vm499, %v577
    %599 = vst.msk [vmem:[%s1 + $0x59] sm:$0x1] %vm499, %v579
    %600 = vst.msk [vmem:[%s1 + $0x71] sm:$0x1] %vm499, %v581
    %601 = vst.msk [vmem:[%s1 + $0x89] sm:$0x1] %vm499, %v583
    %602 = vst.msk [vmem:[%s1 + $0xa1] sm:$0x1] %vm499, %v585
    %603 = vst.msk [vmem:[%s1 + $0xb9] sm:$0x1] %vm499, %v587
    // Predicated region
    $region10: #{tpu_custom_call.1} parent=1 // pred_check
      _
    $region11: #{tpu_custom_call.1} parent=1 // pred_check_branch
      %605 = sbr.rel (0) target = $region13
    $region12: #{tpu_custom_call.1} parent=1 // pred_region
      _
    $region13: #{tpu_custom_call.1} parent=1 // pred_fallthru
      _
    // Predicated region
    $region14: #{tpu_custom_call.1} parent=1 // pred_check
      _
    $region15: #{tpu_custom_call.1} parent=1 // pred_check_branch
      %607 = sbr.rel (0) target = $region17
    $region16: #{tpu_custom_call.1} parent=1 // pred_region
      _
    $region17: #{tpu_custom_call.1} parent=1 // pred_fallthru
      _
    %608 = vsyncpa [#allocation3], 1

</llo_original>
